<compile_context>
chip_gen: v5e
topology: v5e:2x2
jax: 0.10.0
libtpu: 0.0.40
codegen_flags: <defaults>
</compile_context>

<pallas_src>
import jax
import jax.numpy as jnp
from jax import lax
from jax.experimental import pallas as pl
from jax.experimental.pallas import tpu as pltpu


def _round_up(x: int, m: int) -> int:
    return (x + m - 1) // m * m


def _decoder_kernel(x_ref, w_ref, b_ref, o_ref, acc_ref):
    """One (tm, tn) output tile; accumulates over the H (k) grid axis.

    x_ref: (tm, tk)   activations tile
    w_ref: (tn, tk)   weight tile in native (C, H) layout
    b_ref: (1,  tn)   bias tile (f32)
    o_ref: (tm, tn)   output tile
    acc_ref: (tm, tn) f32 accumulator scratch (persists across k)
    """
    k = pl.program_id(2)

    @pl.when(k == 0)
    def _init():
        # Fold the bias into the accumulator once per (i, j) tile.
        acc_ref[...] = jnp.broadcast_to(
            b_ref[...].astype(jnp.float32), acc_ref.shape)

    # x @ W^T without transposing W: contract H axis of both operands (MXU).
    acc_ref[...] += lax.dot_general(
        x_ref[...], w_ref[...],
        dimension_numbers=(((1,), (1,)), ((), ())),
        preferred_element_type=jnp.float32)

    @pl.when(k == pl.num_programs(2) - 1)
    def _store():
        o_ref[...] = acc_ref[...].astype(o_ref.dtype)


def ts_decoder_forward(x, weight, bias, *, tm=256, tn=256, tk=512,
                       compute_dtype=None):
    """Linear decoder head: logits = x @ weight.T + bias.

    Args:
      x:      (B, H) activations.
      weight: (C, H) weights (PyTorch nn.Linear layout; NOT transposed here).
      bias:   (C,)   bias.
      tm/tn/tk: tile sizes for the (B, C, H) grid.
      compute_dtype: optional MXU-input dtype (e.g. jnp.bfloat16); f32 accumulate.
    Returns:
      (B, C) float32 logits.
    """
    B, H = x.shape
    C, Hw = weight.shape
    assert Hw == H, "weight hidden dim must match x hidden dim"

    if compute_dtype is not None:
        x = x.astype(compute_dtype)
        weight = weight.astype(compute_dtype)

    # Clamp tiles to the (padded) problem size; keep (8, 128) legality.
    tm_eff = min(tm, _round_up(B, 8))
    tn_eff = min(tn, _round_up(C, 128))
    tk_eff = min(tk, _round_up(H, 128))

    Bp = _round_up(B, tm_eff)
    Cp = _round_up(C, tn_eff)   # lane-dense (multiple of 128) output tiles
    Hp = _round_up(H, tk_eff)

    x_p = x if (Bp == B and Hp == H) else jnp.pad(x, ((0, Bp - B), (0, Hp - H)))
    w_p = weight if (Cp == C and Hp == H) else jnp.pad(
        weight, ((0, Cp - C), (0, Hp - H)))
    b_p = bias if Cp == C else jnp.pad(bias, ((0, Cp - C),))
    b2d = b_p.reshape(1, Cp).astype(jnp.float32)

    grid = (Bp // tm_eff, Cp // tn_eff, Hp // tk_eff)

    itemsize = jnp.dtype(x_p.dtype).itemsize
    cost = pl.CostEstimate(
        flops=2 * Bp * Cp * Hp,
        transcendentals=0,
        bytes_accessed=(Bp * Hp * itemsize            # x read
                        + Cp * Hp * itemsize          # weight read
                        + Cp * 4                      # bias read
                        + Bp * Cp * 4))               # output write

    out = pl.pallas_call(
        _decoder_kernel,
        out_shape=jax.ShapeDtypeStruct((Bp, Cp), jnp.float32),
        grid_spec=pltpu.PrefetchScalarGridSpec(
            num_scalar_prefetch=0,
            grid=grid,
            in_specs=[
                pl.BlockSpec((tm_eff, tk_eff), lambda i, j, k: (i, k)),  # x
                pl.BlockSpec((tn_eff, tk_eff), lambda i, j, k: (j, k)),  # W (C,H)
                pl.BlockSpec((1, tn_eff), lambda i, j, k: (0, j)),       # bias
            ],
            out_specs=pl.BlockSpec((tm_eff, tn_eff), lambda i, j, k: (i, j)),
            scratch_shapes=[pltpu.VMEM((tm_eff, tn_eff), jnp.float32)],
        ),
        compiler_params=pltpu.CompilerParams(
            dimension_semantics=("parallel", "parallel", "arbitrary")),
        cost_estimate=cost,
    )(x_p, w_p, b2d)

    return out[:B, :C]


if __name__ == "__main__":
    # Small shapes consistent with a classifier head:
    #   batch=2, hidden_size=32, num_classes=8
    B, H, C = 2, 32, 8

    key = jax.random.PRNGKey(0)
    kx, kw, kb = jax.random.split(key, 3)

    x = jax.random.normal(kx, (B, H), dtype=jnp.float32)
    # Deterministic nn.Linear-style init (uniform in +-1/sqrt(H)).
    bound = 1.0 / jnp.sqrt(jnp.float32(H))
    weight = jax.random.uniform(kw, (C, H), jnp.float32, -bound, bound)
    bias = jax.random.uniform(kb, (C,), jnp.float32, -bound, bound)

    y = ts_decoder_forward(x, weight, bias)
    jax.block_until_ready(y)

    y_ref = x @ weight.T + bias
    assert y.shape == (B, C)
    assert jnp.allclose(y, y_ref, atol=2e-3, rtol=2e-3)

    # Second check: multi-tile grid (exercises the accumulator / pl.when path
    # and megacore-parallel axes): grid = (2, 2, 3) with the default tiles.
    B2, H2, C2 = 384, 1280, 320
    k2x, k2w, k2b = jax.random.split(jax.random.PRNGKey(1), 3)
    x2 = jax.random.normal(k2x, (B2, H2), dtype=jnp.float32)
    bound2 = 1.0 / jnp.sqrt(jnp.float32(H2))
    w2 = jax.random.uniform(k2w, (C2, H2), jnp.float32, -bound2, bound2)
    b2 = jax.random.uniform(k2b, (C2,), jnp.float32, -bound2, bound2)

    y2 = ts_decoder_forward(x2, w2, b2)
    jax.block_until_ready(y2)
    y2_ref = x2 @ w2.T + b2
    assert y2.shape == (B2, C2)
    assert jnp.allclose(y2, y2_ref, atol=2e-2, rtol=2e-2)

    print("KERNEL_OK")
</pallas_src>

<mosaic_0001>
module attributes {stable_mosaic.version = 11 : i64} {
  func.func @_decoder_kernel(%arg0: i32, %arg1: i32, %arg2: i32, %arg3: memref<8x128xf32, #tpu.memory_space<vmem>>, %arg4: memref<128x128xf32, #tpu.memory_space<vmem>>, %arg5: memref<1x128xf32, #tpu.memory_space<vmem>>, %arg6: memref<8x128xf32, #tpu.memory_space<vmem>>, %arg7: memref<8x128xf32, #tpu.memory_space<vmem>>) attributes {dimension_semantics = [#tpu.dimension_semantics<parallel>, #tpu.dimension_semantics<parallel>, #tpu.dimension_semantics<arbitrary>], iteration_bounds = array<i64: 1, 1, 1>, scalar_prefetch = 0 : i64, scratch_operands = 1 : i64, tpu.core_type = #tpu.core_type<tc>, window_params = [{transform_indices = @transform_0, window_bounds = array<i64: 8, 128>}, {transform_indices = @transform_1, window_bounds = array<i64: 128, 128>}, {transform_indices = @transform_2, window_bounds = array<i64: 1, 128>}, {transform_indices = @transform_3, window_bounds = array<i64: 8, 128>}]} {
    %c0_i32 = arith.constant 0 : i32
    %0 = arith.cmpi eq, %arg2, %c0_i32 : i32
    %1 = arith.extui %0 : i1 to i32
    %c0_i32_0 = arith.constant 0 : i32
    %2 = arith.cmpi ne, %1, %c0_i32_0 : i32
    scf.if %2 {
      %c0_10 = arith.constant 0 : index
      %c0_11 = arith.constant 0 : index
      %12 = vector.load %arg5[%c0_10, %c0_11] : memref<1x128xf32, #tpu.memory_space<vmem>>, vector<1x128xf32>
      %13 = vector.shape_cast %12 : vector<1x128xf32> to vector<1x128xf32>
      %14 = vector.broadcast %13 : vector<1x128xf32> to vector<8x128xf32>
      %c0_12 = arith.constant 0 : index
      %c0_13 = arith.constant 0 : index
      %15 = vector.load %arg7[%c0_12, %c0_13] : memref<8x128xf32, #tpu.memory_space<vmem>>, vector<8x128xf32>
      tpu.vector_store %arg7[%c0_12, %c0_13], %14 {strides = array<i32>} : memref<8x128xf32, #tpu.memory_space<vmem>>, vector<8x128xf32>,
    } else {
    }
    %c0 = arith.constant 0 : index
    %c0_1 = arith.constant 0 : index
    %3 = vector.load %arg7[%c0, %c0_1] : memref<8x128xf32, #tpu.memory_space<vmem>>, vector<8x128xf32>
    %c0_2 = arith.constant 0 : index
    %c0_3 = arith.constant 0 : index
    %4 = vector.load %arg3[%c0_2, %c0_3] : memref<8x128xf32, #tpu.memory_space<vmem>>, vector<8x128xf32>
    %c0_4 = arith.constant 0 : index
    %c0_5 = arith.constant 0 : index
    %5 = vector.load %arg4[%c0_4, %c0_5] : memref<128x128xf32, #tpu.memory_space<vmem>>, vector<128x128xf32>
    %cst = arith.constant dense<0.000000e+00> : vector<8x128xf32>
    %6 = tpu.matmul %4, %5, %cst {dimension_numbers = #tpu.dot_dimension_numbers<[1], [1], [0], [0], [0, 0, 1, 0], [], []>} : vector<8x128xf32>, vector<128x128xf32>, vector<8x128xf32> -> vector<8x128xf32>
    %7 = arith.addf %3, %6 : vector<8x128xf32>
    %c0_6 = arith.constant 0 : index
    %c0_7 = arith.constant 0 : index
    %8 = vector.load %arg7[%c0_6, %c0_7] : memref<8x128xf32, #tpu.memory_space<vmem>>, vector<8x128xf32>
    tpu.vector_store %arg7[%c0_6, %c0_7], %7 {strides = array<i32>} : memref<8x128xf32, #tpu.memory_space<vmem>>, vector<8x128xf32>,
    %c0_i32_8 = arith.constant 0 : i32
    %9 = arith.cmpi eq, %arg2, %c0_i32_8 : i32
    %10 = arith.extui %9 : i1 to i32
    %c0_i32_9 = arith.constant 0 : i32
    %11 = arith.cmpi ne, %10, %c0_i32_9 : i32
    scf.if %11 {
      %c0_10 = arith.constant 0 : index
      %c0_11 = arith.constant 0 : index
      %12 = vector.load %arg7[%c0_10, %c0_11] : memref<8x128xf32, #tpu.memory_space<vmem>>, vector<8x128xf32>
      %c0_12 = arith.constant 0 : index
      %c0_13 = arith.constant 0 : index
      %13 = vector.load %arg6[%c0_12, %c0_13] : memref<8x128xf32, #tpu.memory_space<vmem>>, vector<8x128xf32>
      tpu.vector_store %arg6[%c0_12, %c0_13], %12 {strides = array<i32>} : memref<8x128xf32, #tpu.memory_space<vmem>>, vector<8x128xf32>,
    } else {
    }
    return
  }
  func.func @transform_0(%arg0: i32, %arg1: i32, %arg2: i32) -> (i32, i32) {
    %c0_i32 = arith.constant 0 : i32
    return %arg0, %arg2 : i32, i32
  }
  func.func @transform_1(%arg0: i32, %arg1: i32, %arg2: i32) -> (i32, i32) {
    %c0_i32 = arith.constant 0 : i32
    return %arg1, %arg2 : i32, i32
  }
  func.func @transform_2(%arg0: i32, %arg1: i32, %arg2: i32) -> (i32, i32) {
    %c0_i32 = arith.constant 0 : i32
    %c0_i32_0 = arith.constant 0 : i32
    return %c0_i32, %arg1 : i32, i32
  }
  func.func @transform_3(%arg0: i32, %arg1: i32, %arg2: i32) -> (i32, i32) {
    %c0_i32 = arith.constant 0 : i32
    return %arg0, %arg1 : i32, i32
  }
}

</mosaic_0001>

<llo_original>
// kernel: tpu_custom_call.1
$region0: #{tpu_custom_call.1}
  #allocation0 [shape = 'u32[]', space=smem, size = 0x4, offset = 0x4, fixed_abs, tag = 'smem constant byte address 0x4 - core index']
  #allocation1 [shape = 'u32[72,128]{1,0:T(1,128)}', space=vmem, size = 0x9000, scoped, tag = 'internal scratch']
  #allocation2 [shape = 'f32[8,128]{1,0:T(8,128)}', space=vmem, size = 0x1000, scoped, tag = 'scratch operand']
  %s0 = inlined_call_operand.hbm [shape: f32[8,128], index: 0, kind: input, shape index: {}]
  %s1 = inlined_call_operand.hbm [shape: f32[128,128], index: 1, kind: input, shape index: {}]
  %s2 = inlined_call_operand.vmem [shape: f32[1,128], index: 2, kind: input, shape index: {}]
  %s3 = inlined_call_operand.hbm [shape: f32[8,128], index: 3, kind: output, shape index: {}]
  %s4 = sld [smem:[#allocation0]]
  $region38: #{tpu_custom_call.1} parent=0
    _
  %s6 = ssub.s32 1, %s4
  %s7 = scalar_select 0, %s6, %s4
  $region1: #{tpu_custom_call.1} parent=0
    #allocation3 [shape = 'u8[4096]{0}', space=vmem, size = 0x1000, scoped, tag = 'input window, operand 0, single buffered']
    #allocation4 [shape = 's32[1]{0}', space=sflag, size = 0x4, scoped, tag = 'scoped memory for tpu_custom_call.1']
    #allocation5 [shape = 's32[1]{0}', space=sflag, size = 0x4, scoped, tag = 'scoped memory for tpu_custom_call.1']
    #allocation6 [shape = 'u8[65536]{0}', space=vmem, size = 0x10000, scoped, tag = 'input window, operand 1, single buffered']
    #allocation7 [shape = 's32[1]{0}', space=sflag, size = 0x4, scoped, tag = 'scoped memory for tpu_custom_call.1']
    #allocation8 [shape = 'u8[4096]{0}', space=vmem, size = 0x1000, scoped, tag = 'output window, operand 0, single buffered']
    %8 = vsyncpa [#allocation4], 0
    %9 = vsyncpa [#allocation7], 0
    %10 = vsyncpa [#allocation5], 0
    // Predicated region
    $region2: #{tpu_custom_call.1} parent=1 // pred_check
      _
    $region3: #{tpu_custom_call.1} parent=1 // pred_check_branch
      %12 = sbr.rel (0) target = $region5
    $region4: #{tpu_custom_call.1} parent=1 // pred_region
      %14 = vsyncadd [#allocation4], 0
      %s16 = sshll.u32 %s0, 4
      %s17 = int_to_ptr.hbm [resolvable:$true] %s16
      %s18 = sshll.u32 [#allocation3], 4
      %s19 = int_to_ptr.vmem [resolvable:$true] %s18
      %21 = dma.hbm_to_vmem [thread:$0]  %s17, 128, %s19, [#allocation4]
    $region5: #{tpu_custom_call.1} parent=1 // pred_fallthru
      _
    // Predicated region
    $region6: #{tpu_custom_call.1} parent=1 // pred_check
      _
    $region7: #{tpu_custom_call.1} parent=1 // pred_check_branch
      %23 = sbr.rel (0) target = $region9
    $region8: #{tpu_custom_call.1} parent=1 // pred_region
      %25 = vsyncadd [#allocation7], 0
      %s26 = sshll.u32 %s1, 4
      %s27 = int_to_ptr.hbm [resolvable:$true] %s26
      %s28 = sshll.u32 [#allocation6], 4
      %s29 = int_to_ptr.vmem [resolvable:$true] %s28
      %34 = dma.hbm_to_vmem [thread:$0]  %s27, 2048, %s29, [#allocation7], 128, 128, 8
    $region9: #{tpu_custom_call.1} parent=1 // pred_fallthru
      _
    // Predicated region
    $region10: #{tpu_custom_call.1} parent=1 // pred_check
      _
    $region11: #{tpu_custom_call.1} parent=1 // pred_check_branch
      %36 = sbr.rel (0) target = $region13
    $region12: #{tpu_custom_call.1} parent=1 // pred_region
      _
    $region13: #{tpu_custom_call.1} parent=1 // pred_fallthru
      _
    // Predicated region
    $region14: #{tpu_custom_call.1} parent=1 // pred_check
      _
    $region15: #{tpu_custom_call.1} parent=1 // pred_check_branch
      %38 = sbr.rel (0) target = $region17
    $region16: #{tpu_custom_call.1} parent=1 // pred_region
      %40 = dma.done [#allocation4], 128
    $region17: #{tpu_custom_call.1} parent=1 // pred_fallthru
      _
    // Predicated region
    $region18: #{tpu_custom_call.1} parent=1 // pred_check
      _
    $region19: #{tpu_custom_call.1} parent=1 // pred_check_branch
      %42 = sbr.rel (0) target = $region21
    $region20: #{tpu_custom_call.1} parent=1 // pred_region
      %44 = dma.done [#allocation7], 2048
    $region21: #{tpu_custom_call.1} parent=1 // pred_fallthru
      _
    %p45 = scmp.eq.s32.totalorder 0, 0
    // Predicated region
    $region22: #{tpu_custom_call.1} parent=1 // pred_check
      %p46 = pneg %p45
    $region23: #{tpu_custom_call.1} parent=1 // pred_check_branch
      %48 = sbr.rel (%p46) target = $region25
    $region24: #{tpu_custom_call.1} parent=1 // pred_region
      %v49 = vld [vmem:[%s2] sm:$0x1]
      %v51 = vperm.slane %v49, 0
      %53 = vst [vmem:[#allocation2] sm:$0xff] %v51
    $region25: #{tpu_custom_call.1} parent=1 // pred_fallthru
      _
    %v54 = vld [vmem:[#allocation2] sm:$0xff]
    %v55 = vld [vmem:[#allocation3] sm:$0xff]
    %v56 = vld [vmem:[#allocation6] sm:$0xff]
    %v57 = vld [vmem:[#allocation6 + $0x8] sm:$0xff]
    %v58 = vld [vmem:[#allocation6 + $0x10] sm:$0xff]
    %v59 = vld [vmem:[#allocation6 + $0x18] sm:$0xff]
    %v60 = vld [vmem:[#allocation6 + $0x20] sm:$0xff]
    %v61 = vld [vmem:[#allocation6 + $0x28] sm:$0xff]
    %v62 = vld [vmem:[#allocation6 + $0x30] sm:$0xff]
    %v63 = vld [vmem:[#allocation6 + $0x38] sm:$0xff]
    %v64 = vld [vmem:[#allocation6 + $0x40] sm:$0xff]
    %v65 = vld [vmem:[#allocation6 + $0x48] sm:$0xff]
    %v66 = vld [vmem:[#allocation6 + $0x50] sm:$0xff]
    %v67 = vld [vmem:[#allocation6 + $0x58] sm:$0xff]
    %v68 = vld [vmem:[#allocation6 + $0x60] sm:$0xff]
    %v69 = vld [vmem:[#allocation6 + $0x68] sm:$0xff]
    %v70 = vld [vmem:[#allocation6 + $0x70] sm:$0xff]
    %v71 = vld [vmem:[#allocation6 + $0x78] sm:$0xff]
    %72 = vmatpush.xpose.msra.mxu0 %v71
    %73 = vmatpush.xpose.msra.mxu0 %v70
    %74 = vmatpush.xpose.msra.mxu0 %v69
    %75 = vmatpush.xpose.msra.mxu0 %v68
    %76 = vmatpush.xpose.msra.mxu0 %v67
    %77 = vmatpush.xpose.msra.mxu0 %v66
    %78 = vmatpush.xpose.msra.mxu0 %v65
    %79 = vmatpush.xpose.msra.mxu0 %v64
    %80 = vmatpush.xpose.msra.mxu0 %v63
    %81 = vmatpush.xpose.msra.mxu0 %v62
    %82 = vmatpush.xpose.msra.mxu0 %v61
    %83 = vmatpush.xpose.msra.mxu0 %v60
    %84 = vmatpush.xpose.msra.mxu0 %v59
    %85 = vmatpush.xpose.msra.mxu0 %v58
    %86 = vmatpush.xpose.msra.mxu0 %v57
    %87 = vmatpush.xpose.msra.mxu0 %v56
    %88 = vmatmul.f32.gmra.mxu0 %v55
    %v89 = vpop.f32.mrf.mxu0
    %v90 = vadd.f32 0.0, %v89
    %91 = vdwg.mxu0
    %v92 = vadd.f32 %v54, %v90
    %93 = vst [vmem:[#allocation2] sm:$0xff] %v92
    // Predicated region
    $region26: #{tpu_custom_call.1} parent=1 // pred_check
      %p94 = pneg %p45
    $region27: #{tpu_custom_call.1} parent=1 // pred_check_branch
      %96 = sbr.rel (%p94) target = $region29
    $region28: #{tpu_custom_call.1} parent=1 // pred_region
      %v97 = vld [vmem:[#allocation2] sm:$0xff]
      %98 = vst [vmem:[#allocation8] sm:$0xff] %v97
    $region29: #{tpu_custom_call.1} parent=1 // pred_fallthru
      _
    // Predicated region
    $region30: #{tpu_custom_call.1} parent=1 // pred_check
      _
    $region31: #{tpu_custom_call.1} parent=1 // pred_check_branch
      %100 = sbr.rel (0) target = $region33
    $region32: #{tpu_custom_call.1} parent=1 // pred_region
      %102 = vsyncadd [#allocation5], 0
      %s104 = sshll.u32 [#allocation8], 4
      %s105 = int_to_ptr.vmem [resolvable:$true] %s104
      %s106 = sshll.u32 %s3, 4
      %s107 = int_to_ptr.hbm [resolvable:$true] %s106
      %109 = dma.vmem_to_hbm [thread:$0]  %s105, 128, %s107, [#allocation5]
    $region33: #{tpu_custom_call.1} parent=1 // pred_fallthru
      _
    // Predicated region
    $region34: #{tpu_custom_call.1} parent=1 // pred_check
      _
    $region35: #{tpu_custom_call.1} parent=1 // pred_check_branch
      %111 = sbr.rel (0) target = $region37
    $region36: #{tpu_custom_call.1} parent=1 // pred_region
      %113 = dma.done [#allocation5], 128
    $region37: #{tpu_custom_call.1} parent=1 // pred_fallthru
      _
    %114 = vsyncpa [#allocation4], 1
    %115 = vsyncpa [#allocation7], 1
    %116 = vsyncpa [#allocation5], 1

</llo_original>
